<compile_context>
chip_gen: v6e
topology: v6e:2x2x1
jax: 0.10.0
libtpu: 0.0.40
codegen_flags: <defaults>
</compile_context>

<pallas_src>
import jax
import jax.numpy as jnp
from jax.experimental import pallas as pl
from jax.experimental.pallas import tpu as pltpu


def _round_up(x, m):
    return ((x + m - 1) // m) * m


def _vmem_capacity_bytes():
    try:
        info = pltpu.get_tpu_info()
        cap = getattr(info, "vmem_capacity_bytes", None)
        if cap:
            return int(cap)
    except Exception:
        pass
    return 64 * 1024 * 1024  # conservative fallback: v7x per-TC VMEM


def _split_bf16_planes(x_f32):
    """Exact 3-plane bf16 split: hi + mid + lo reconstructs f32 x."""
    hi = x_f32.astype(jnp.bfloat16)
    r1 = x_f32 - hi.astype(jnp.float32)
    mid = r1.astype(jnp.bfloat16)
    lo = (r1 - mid.astype(jnp.float32)).astype(jnp.bfloat16)
    return jnp.stack([hi, mid, lo], axis=0)  # (3, D, N) bf16


def _distmult_kernel(idx_ref, tab_ref, out_ref):
    # idx_ref: (1, 3*T) int32 — per-tile flat row [h | r(+n_ent) | t];
    #          padded lanes hold -1 (one-hot column all-zero).
    # tab_ref: (3, D, N) bf16 — hi/mid/lo planes of the combined transposed
    #          table [ent; rel]^T, VMEM-resident across the whole grid.
    # out_ref: (2, T) f32 — row 0: score, row 1: per-row sum-of-squares.
    n = tab_ref.shape[2]
    three_t = idx_ref.shape[1]
    t = three_t // 3

    idx = idx_ref[...]                                        # (1, 3T) int32
    iota_n = jax.lax.broadcasted_iota(jnp.int32, (n, 1), 0)   # (N, 1)
    oh = (iota_n == idx).astype(jnp.bfloat16)                 # (N, 3T) exact 0/1

    # Fused gather via MXU: (D, 3T) = plane(D, N) @ one_hot(N, 3T), one pass
    # per mantissa plane, f32 accumulation -> exact f32 table rows.
    dn = (((1,), (0,)), ((), ()))
    g = jax.lax.dot_general(tab_ref[0], oh, dn,
                            preferred_element_type=jnp.float32)
    g = g + jax.lax.dot_general(tab_ref[1], oh, dn,
                                preferred_element_type=jnp.float32)
    g = g + jax.lax.dot_general(tab_ref[2], oh, dn,
                                preferred_element_type=jnp.float32)

    h_e = g[:, 0:t]            # (D, T) head rows
    r_e = g[:, t:2 * t]        # (D, T) relation rows
    t_e = g[:, 2 * t:3 * t]    # (D, T) tail rows

    # score = -sum_d h*t*r   -> (1, T) lane-dense
    score = -jnp.sum(h_e * t_e * r_e, axis=0, keepdims=True)
    # per-row sum of squares over all three gathers, finished in wrapper
    sq_all = jnp.sum(g * g, axis=0, keepdims=True)            # (1, 3T)
    sq = sq_all[:, 0:t] + sq_all[:, t:2 * t] + sq_all[:, 2 * t:3 * t]

    out_ref[0:1, :] = score
    out_ref[1:2, :] = sq


@jax.jit
def distmult_forward(batch_input, ent_embeddings, rel_embeddings):
    """Mirrors DistMult.forward.

    batch_input: (B, 3) int32 triples, columns are (head, relation, tail).
    Returns (score: (B,), regul: scalar), both float32.
    """
    B = batch_input.shape[0]
    n_ent, D = ent_embeddings.shape
    n_rel = rel_embeddings.shape[0]
    N = n_ent + n_rel

    # Combined transposed table (D, N), then exact 3-plane bf16 split.
    comb_t = jnp.concatenate(
        [ent_embeddings, rel_embeddings], axis=0).astype(jnp.float32).T
    tab = _split_bf16_planes(comb_t)                          # (3, D, N) bf16

    # ---- tile size derived from a per-generation VMEM budget --------------
    vmem_cap = _vmem_capacity_bytes()
    # Resident table planes (auto-pipelined => double-buffered) in bf16.
    table_bytes = 2 * 3 * _round_up(D, 16) * _round_up(N, 128) * 2
    # Working-set bytes per lane of the batch tile.
    per_lane = (6 * _round_up(N, 16)       # (N, 3T) bf16 one-hot
                + 24 * _round_up(D, 8)     # (D, 3T) f32 gathered + temps
                + 512)                     # idx/out tiles + slack
    budget = max(int(0.45 * vmem_cap) - table_bytes, per_lane * 128)
    tile_b = max(128, min(2048, (budget // per_lane) // 128 * 128))
    tile_b = min(tile_b, _round_up(B, 128))
    b_pad = _round_up(B, tile_b)
    num_tiles = b_pad // tile_b

    vmem_limit = int(min(0.9 * vmem_cap,
                         max(32 << 20,
                             table_bytes + per_lane * tile_b + (8 << 20))))

    # ---- indices: per-tile flat [h | r+n_ent | t] row on the lane axis ----
    h_idx = batch_input[:, 0].astype(jnp.int32)
    r_idx = batch_input[:, 1].astype(jnp.int32) + n_ent   # offset into combined table
    t_idx = batch_input[:, 2].astype(jnp.int32)
    idx3 = jnp.stack([h_idx, r_idx, t_idx], axis=0)       # (3, B)
    if b_pad != B:
        idx3 = jnp.pad(idx3, ((0, 0), (0, b_pad - B)), constant_values=-1)
    idx_flat = (idx3.reshape(3, num_tiles, tile_b)
                .transpose(1, 0, 2)
                .reshape(1, num_tiles * 3 * tile_b))

    flops = 18 * D * N * b_pad + 10 * D * b_pad
    bytes_accessed = 3 * D * N * 2 + 3 * b_pad * 4 + 2 * b_pad * 4

    out = pl.pallas_call(
        _distmult_kernel,
        out_shape=jax.ShapeDtypeStruct((2, b_pad), jnp.float32),
        grid_spec=pltpu.PrefetchScalarGridSpec(
            num_scalar_prefetch=0,
            grid=(num_tiles,),
            in_specs=[
                # index tile: flat [h|r|t] chunk i on the lane axis
                pl.BlockSpec((1, 3 * tile_b), lambda i: (0, i)),
                # whole 3-plane table, resident across the grid
                pl.BlockSpec((3, D, N), lambda i: (0, 0, 0)),
            ],
            out_specs=pl.BlockSpec((2, tile_b), lambda i: (0, i)),
        ),
        compiler_params=pltpu.CompilerParams(
            dimension_semantics=("parallel",),
            vmem_limit_bytes=vmem_limit),
        cost_estimate=pl.CostEstimate(
            flops=flops, transcendentals=0, bytes_accessed=bytes_accessed),
    )(idx_flat, tab)

    score = out[0, :B]
    # mean(h^2) + mean(t^2) + mean(r^2) == (sum h^2 + sum t^2 + sum r^2)/(B*D)
    regul = jnp.sum(out[1, :]) / (B * D)
    return score, regul


def xavier_uniform(key, shape):
    fan_in, fan_out = shape[0], shape[1]
    limit = (6.0 / (fan_in + fan_out)) ** 0.5
    return jax.random.uniform(
        key, shape, dtype=jnp.float32, minval=-limit, maxval=limit
    )


if __name__ == "__main__":
    emb_dim = 32
    n_entity = 64
    n_relation = 16
    batch = 8

    root = jax.random.PRNGKey(0)
    k_ent, k_rel, k_h, k_r, k_t = jax.random.split(root, 5)

    # Deterministic parameter init (module __init__: two Embedding tables).
    ent_embeddings = xavier_uniform(k_ent, (n_entity, emb_dim))
    rel_embeddings = xavier_uniform(k_rel, (n_relation, emb_dim))

    # batch_input: (B, 3) int triples — columns (head, relation, tail).
    heads = jax.random.randint(k_h, (batch, 1), 0, n_entity, dtype=jnp.int32)
    rels = jax.random.randint(k_r, (batch, 1), 0, n_relation, dtype=jnp.int32)
    tails = jax.random.randint(k_t, (batch, 1), 0, n_entity, dtype=jnp.int32)
    batch_input = jnp.concatenate([heads, rels, tails], axis=1)

    score, regul = distmult_forward(batch_input, ent_embeddings, rel_embeddings)
    jax.block_until_ready((score, regul))

    # Pure-JAX reference check.
    h_re = jnp.take(ent_embeddings, batch_input[:, 0], axis=0)
    t_re = jnp.take(ent_embeddings, batch_input[:, 2], axis=0)
    r_re = jnp.take(rel_embeddings, batch_input[:, 1], axis=0)
    score_ref = -jnp.sum(h_re * t_re * r_re, axis=-1)
    regul_ref = jnp.mean(h_re**2) + jnp.mean(t_re**2) + jnp.mean(r_re**2)
    assert score.shape == (batch,)
    assert jnp.allclose(score, score_ref, atol=1e-5, rtol=1e-5)
    assert jnp.allclose(regul, regul_ref, atol=1e-5, rtol=1e-5)

    print("KERNEL_OK")
</pallas_src>

<mosaic_0001>
module attributes {stable_mosaic.version = 11 : i64} {
  func.func @_distmult_kernel(%arg0: i32, %arg1: memref<1x384xi32, #tpu.memory_space<vmem>>, %arg2: memref<3x32x80xbf16, #tpu.memory_space<vmem>>, %arg3: memref<2x128xf32, #tpu.memory_space<vmem>>) attributes {dimension_semantics = [#tpu.dimension_semantics<parallel>], iteration_bounds = array<i64: 1>, scalar_prefetch = 0 : i64, scratch_operands = 0 : i64, tpu.core_type = #tpu.core_type<tc>, window_params = [{transform_indices = @transform_0, window_bounds = array<i64: 1, 384>}, {pipeline_mode = #tpu.pipeline_mode<synchronous>, transform_indices = @transform_1, window_bounds = array<i64: 3, 32, 80>}, {transform_indices = @transform_2, window_bounds = array<i64: 2, 128>}]} {
    %c0 = arith.constant 0 : index
    %c0_0 = arith.constant 0 : index
    %0 = vector.load %arg1[%c0, %c0_0] : memref<1x384xi32, #tpu.memory_space<vmem>>, vector<1x384xi32>
    %1 = tpu.iota {dimensions = array<i32: 0>} : vector<80x1xi32>
    %2 = vector.broadcast %1 : vector<80x1xi32> to vector<80x384xi32>
    %3 = vector.broadcast %0 : vector<1x384xi32> to vector<80x384xi32>
    %4 = arith.cmpi eq, %2, %3 : vector<80x384xi32>
    %5 = arith.extui %4 : vector<80x384xi1> to vector<80x384xi32>
    %6 = arith.sitofp %5 : vector<80x384xi32> to vector<80x384xf32>
    %7 = arith.truncf %6 : vector<80x384xf32> to vector<80x384xbf16>
    %c0_1 = arith.constant 0 : index
    %c0_2 = arith.constant 0 : index
    %c0_3 = arith.constant 0 : index
    %8 = vector.load %arg2[%c0_1, %c0_2, %c0_3] : memref<3x32x80xbf16, #tpu.memory_space<vmem>>, vector<1x32x80xbf16>
    %9 = vector.shape_cast %8 : vector<1x32x80xbf16> to vector<32x80xbf16>
    %cst = arith.constant dense<0.000000e+00> : vector<32x384xf32>
    %10 = tpu.matmul %9, %7, %cst {dimension_numbers = #tpu.dot_dimension_numbers<[1], [0], [0], [1], [0, 0, 1, 1], [], []>} : vector<32x80xbf16>, vector<80x384xbf16>, vector<32x384xf32> -> vector<32x384xf32>
    %c1 = arith.constant 1 : index
    %c0_4 = arith.constant 0 : index
    %c0_5 = arith.constant 0 : index
    %11 = vector.load %arg2[%c1, %c0_4, %c0_5] : memref<3x32x80xbf16, #tpu.memory_space<vmem>>, vector<1x32x80xbf16>
    %12 = vector.shape_cast %11 : vector<1x32x80xbf16> to vector<32x80xbf16>
    %cst_6 = arith.constant dense<0.000000e+00> : vector<32x384xf32>
    %13 = tpu.matmul %12, %7, %cst_6 {dimension_numbers = #tpu.dot_dimension_numbers<[1], [0], [0], [1], [0, 0, 1, 1], [], []>} : vector<32x80xbf16>, vector<80x384xbf16>, vector<32x384xf32> -> vector<32x384xf32>
    %14 = arith.addf %10, %13 : vector<32x384xf32>
    %c2 = arith.constant 2 : index
    %c0_7 = arith.constant 0 : index
    %c0_8 = arith.constant 0 : index
    %15 = vector.load %arg2[%c2, %c0_7, %c0_8] : memref<3x32x80xbf16, #tpu.memory_space<vmem>>, vector<1x32x80xbf16>
    %16 = vector.shape_cast %15 : vector<1x32x80xbf16> to vector<32x80xbf16>
    %cst_9 = arith.constant dense<0.000000e+00> : vector<32x384xf32>
    %17 = tpu.matmul %16, %7, %cst_9 {dimension_numbers = #tpu.dot_dimension_numbers<[1], [0], [0], [1], [0, 0, 1, 1], [], []>} : vector<32x80xbf16>, vector<80x384xbf16>, vector<32x384xf32> -> vector<32x384xf32>
    %18 = arith.addf %14, %17 : vector<32x384xf32>
    %19 = vector.extract_strided_slice %18 {offsets = [0, 0], sizes = [32, 128], strides = [1, 1]} : vector<32x384xf32> to vector<32x128xf32>
    %20 = vector.extract_strided_slice %18 {offsets = [0, 128], sizes = [32, 128], strides = [1, 1]} : vector<32x384xf32> to vector<32x128xf32>
    %21 = vector.extract_strided_slice %18 {offsets = [0, 256], sizes = [32, 128], strides = [1, 1]} : vector<32x384xf32> to vector<32x128xf32>
    %22 = arith.mulf %19, %21 : vector<32x128xf32>
    %23 = arith.mulf %22, %20 : vector<32x128xf32>
    %cst_10 = arith.constant dense<0.000000e+00> : vector<128xf32>
    %24 = vector.multi_reduction <add>, %23, %cst_10 [0] : vector<32x128xf32> to vector<128xf32>
    %25 = vector.shape_cast %24 : vector<128xf32> to vector<1x128xf32>
    %cst_11 = arith.constant 0.000000e+00 : f32
    %26 = vector.broadcast %cst_11 : f32 to vector<1x128xf32>
    %27 = arith.subf %26, %25 : vector<1x128xf32>
    %28 = arith.mulf %18, %18 : vector<32x384xf32>
    %cst_12 = arith.constant dense<0.000000e+00> : vector<384xf32>
    %29 = vector.multi_reduction <add>, %28, %cst_12 [0] : vector<32x384xf32> to vector<384xf32>
    %30 = vector.shape_cast %29 : vector<384xf32> to vector<1x384xf32>
    %31 = vector.extract_strided_slice %30 {offsets = [0, 0], sizes = [1, 128], strides = [1, 1]} : vector<1x384xf32> to vector<1x128xf32>
    %32 = vector.extract_strided_slice %30 {offsets = [0, 128], sizes = [1, 128], strides = [1, 1]} : vector<1x384xf32> to vector<1x128xf32>
    %33 = arith.addf %31, %32 : vector<1x128xf32>
    %34 = vector.extract_strided_slice %30 {offsets = [0, 256], sizes = [1, 128], strides = [1, 1]} : vector<1x384xf32> to vector<1x128xf32>
    %35 = arith.addf %33, %34 : vector<1x128xf32>
    %c0_13 = arith.constant 0 : index
    %c0_14 = arith.constant 0 : index
    %36 = vector.load %arg3[%c0_13, %c0_14] : memref<2x128xf32, #tpu.memory_space<vmem>>, vector<1x128xf32>
    tpu.vector_store %arg3[%c0_13, %c0_14], %27 {strides = array<i32>} : memref<2x128xf32, #tpu.memory_space<vmem>>, vector<1x128xf32>,
    %c1_15 = arith.constant 1 : index
    %c0_16 = arith.constant 0 : index
    %37 = vector.load %arg3[%c1_15, %c0_16] : memref<2x128xf32, #tpu.memory_space<vmem>>, vector<1x128xf32>
    tpu.vector_store %arg3[%c1_15, %c0_16], %35 {strides = array<i32>} : memref<2x128xf32, #tpu.memory_space<vmem>>, vector<1x128xf32>,
    return
  }
  func.func @transform_0(%arg0: i32) -> (i32, i32) {
    %c0_i32 = arith.constant 0 : i32
    %c0_i32_0 = arith.constant 0 : i32
    return %c0_i32, %arg0 : i32, i32
  }
  func.func @transform_1(%arg0: i32) -> (i32, i32, i32) {
    %c0_i32 = arith.constant 0 : i32
    %c0_i32_0 = arith.constant 0 : i32
    %c0_i32_1 = arith.constant 0 : i32
    %c0_i32_2 = arith.constant 0 : i32
    return %c0_i32, %c0_i32_0, %c0_i32_1 : i32, i32, i32
  }
  func.func @transform_2(%arg0: i32) -> (i32, i32) {
    %c0_i32 = arith.constant 0 : i32
    %c0_i32_0 = arith.constant 0 : i32
    return %c0_i32, %arg0 : i32, i32
  }
}

</mosaic_0001>

<llo_original>
// kernel: distmult_forward.1
$region0: #{distmult_forward.1}
  #allocation0 [shape = 'u32[]', space=smem, size = 0x4, offset = 0x4, fixed_abs, tag = 'smem constant byte address 0x4 - core index']
  #allocation1 [shape = 'u32[144,128]{1,0:T(1,128)}', space=vmem, size = 0x12000, scoped, tag = 'internal scratch']
  %s0 = inlined_call_operand.vmem [shape: s32[1,384], index: 0, kind: input, shape index: {}]
  %s1 = inlined_call_operand.vmem [shape: bf16[3,32,80], index: 1, kind: input, shape index: {}]
  %s2 = inlined_call_operand.vmem [shape: f32[2,128], index: 2, kind: output, shape index: {}]
  %s3 = sld [smem:[#allocation0]]
  $region18: #{distmult_forward.1} parent=0
    _
  %s5 = ssub.s32 1, %s3
  %s6 = scalar_select 0, %s5, %s3
  // Predicated region
  $region2: #{distmult_forward.1} parent=0 // pred_check
    _
  $region3: #{distmult_forward.1} parent=0 // pred_check_branch
    %8 = sbr.rel (0) target = $region5
  $region4: #{distmult_forward.1} parent=0 // pred_region
    _
  $region5: #{distmult_forward.1} parent=0 // pred_fallthru
    _
  // Predicated region
  $region6: #{distmult_forward.1} parent=0 // pred_check
    _
  $region7: #{distmult_forward.1} parent=0 // pred_check_branch
    %10 = sbr.rel (0) target = $region9
  $region8: #{distmult_forward.1} parent=0 // pred_region
    _
  $region9: #{distmult_forward.1} parent=0 // pred_fallthru
    _
  %v12 = vld [vmem:[%s0] sm:$0x7]
  %v13 = vlaneseq
  %v14 = vshrl.u32 %v13, 7
  %v15 = vadd.s32 %v14, 8
  %v16 = vadd.s32 %v14, 16
  %v17 = vadd.s32 %v14, 24
  %v18 = vadd.s32 %v14, 32
  %v19 = vadd.s32 %v14, 40
  %v20 = vadd.s32 %v14, 48
  %v21 = vadd.s32 %v14, 56
  %v22 = vadd.s32 %v14, 64
  %v23 = vadd.s32 %v14, 72
  %v24 = vlaneseq
  %v25 = vshrl.u32 %v24, 7
  %v26 = vsub.s32 0, %v25
  %v27 = vrot.slane %v12, %v26
  %v28 = vlaneseq
  %v29 = vshrl.u32 %v28, 7
  %v30 = vsub.s32 1, %v29
  %v31 = vrot.slane %v12, %v30
  %v32 = vlaneseq
  %v33 = vshrl.u32 %v32, 7
  %v34 = vsub.s32 2, %v33
  %v35 = vrot.slane %v12, %v34
  %vm36 = vcmp.eq.s32.totalorder %v14, %v27
  %vm37 = vcmp.eq.s32.totalorder %v14, %v31
  %vm38 = vcmp.eq.s32.totalorder %v14, %v35
  %vm39 = vcmp.eq.s32.totalorder %v15, %v27
  %vm40 = vcmp.eq.s32.totalorder %v15, %v31
  %vm41 = vcmp.eq.s32.totalorder %v15, %v35
  %vm42 = vcmp.eq.s32.totalorder %v16, %v27
  %vm43 = vcmp.eq.s32.totalorder %v16, %v31
  %vm44 = vcmp.eq.s32.totalorder %v16, %v35
  %vm45 = vcmp.eq.s32.totalorder %v17, %v27
  %vm46 = vcmp.eq.s32.totalorder %v17, %v31
  %vm47 = vcmp.eq.s32.totalorder %v17, %v35
  %vm48 = vcmp.eq.s32.totalorder %v18, %v27
  %vm49 = vcmp.eq.s32.totalorder %v18, %v31
  %vm50 = vcmp.eq.s32.totalorder %v18, %v35
  %vm51 = vcmp.eq.s32.totalorder %v19, %v27
  %vm52 = vcmp.eq.s32.totalorder %v19, %v31
  %vm53 = vcmp.eq.s32.totalorder %v19, %v35
  %vm54 = vcmp.eq.s32.totalorder %v20, %v27
  %vm55 = vcmp.eq.s32.totalorder %v20, %v31
  %vm56 = vcmp.eq.s32.totalorder %v20, %v35
  %vm57 = vcmp.eq.s32.totalorder %v21, %v27
  %vm58 = vcmp.eq.s32.totalorder %v21, %v31
  %vm59 = vcmp.eq.s32.totalorder %v21, %v35
  %vm60 = vcmp.eq.s32.totalorder %v22, %v27
  %vm61 = vcmp.eq.s32.totalorder %v22, %v31
  %vm62 = vcmp.eq.s32.totalorder %v22, %v35
  %vm63 = vcmp.eq.s32.totalorder %v23, %v27
  %vm64 = vcmp.eq.s32.totalorder %v23, %v31
  %vm65 = vcmp.eq.s32.totalorder %v23, %v35
  %v66 = vsel %vm36, 1, 0
  %v67 = vsel %vm37, 1, 0
  %v68 = vsel %vm38, 1, 0
  %v69 = vsel %vm39, 1, 0
  %v70 = vsel %vm40, 1, 0
  %v71 = vsel %vm41, 1, 0
  %v72 = vsel %vm42, 1, 0
  %v73 = vsel %vm43, 1, 0
  %v74 = vsel %vm44, 1, 0
  %v75 = vsel %vm45, 1, 0
  %v76 = vsel %vm46, 1, 0
  %v77 = vsel %vm47, 1, 0
  %v78 = vsel %vm48, 1, 0
  %v79 = vsel %vm49, 1, 0
  %v80 = vsel %vm50, 1, 0
  %v81 = vsel %vm51, 1, 0
  %v82 = vsel %vm52, 1, 0
  %v83 = vsel %vm53, 1, 0
  %v84 = vsel %vm54, 1, 0
  %v85 = vsel %vm55, 1, 0
  %v86 = vsel %vm56, 1, 0
  %v87 = vsel %vm57, 1, 0
  %v88 = vsel %vm58, 1, 0
  %v89 = vsel %vm59, 1, 0
  %v90 = vsel %vm60, 1, 0
  %v91 = vsel %vm61, 1, 0
  %v92 = vsel %vm62, 1, 0
  %v93 = vsel %vm63, 1, 0
  %v94 = vsel %vm64, 1, 0
  %v95 = vsel %vm65, 1, 0
  %v96 = vcvt.s32.f32 %v66
  %v97 = vcvt.s32.f32 %v67
  %v98 = vcvt.s32.f32 %v68
  %v99 = vcvt.s32.f32 %v69
  %v100 = vcvt.s32.f32 %v70
  %v101 = vcvt.s32.f32 %v71
  %v102 = vcvt.s32.f32 %v72
  %v103 = vcvt.s32.f32 %v73
  %v104 = vcvt.s32.f32 %v74
  %v105 = vcvt.s32.f32 %v75
  %v106 = vcvt.s32.f32 %v76
  %v107 = vcvt.s32.f32 %v77
  %v108 = vcvt.s32.f32 %v78
  %v109 = vcvt.s32.f32 %v79
  %v110 = vcvt.s32.f32 %v80
  %v111 = vcvt.s32.f32 %v81
  %v112 = vcvt.s32.f32 %v82
  %v113 = vcvt.s32.f32 %v83
  %v114 = vcvt.s32.f32 %v84
  %v115 = vcvt.s32.f32 %v85
  %v116 = vcvt.s32.f32 %v86
  %v117 = vcvt.s32.f32 %v87
  %v118 = vcvt.s32.f32 %v88
  %v119 = vcvt.s32.f32 %v89
  %v120 = vcvt.s32.f32 %v90
  %v121 = vcvt.s32.f32 %v91
  %v122 = vcvt.s32.f32 %v92
  %v123 = vcvt.s32.f32 %v93
  %v124 = vcvt.s32.f32 %v94
  %v125 = vcvt.s32.f32 %v95
  %v126 = vpack.c.bf16 %v99, %v96
  %v127 = vpack.c.bf16 %v100, %v97
  %v128 = vpack.c.bf16 %v101, %v98
  %v129 = vpack.c.bf16 %v105, %v102
  %v130 = vpack.c.bf16 %v106, %v103
  %v131 = vpack.c.bf16 %v107, %v104
  %v132 = vpack.c.bf16 %v111, %v108
  %v133 = vpack.c.bf16 %v112, %v109
  %v134 = vpack.c.bf16 %v113, %v110
  %v135 = vpack.c.bf16 %v117, %v114
  %v136 = vpack.c.bf16 %v118, %v115
  %v137 = vpack.c.bf16 %v119, %v116
  %v138 = vpack.c.bf16 %v123, %v120
  %v139 = vpack.c.bf16 %v124, %v121
  %v140 = vpack.c.bf16 %v125, %v122
  %v141 = vld [vmem:[%s1] sm:$0xf]
  %v142 = vld [vmem:[%s1 + $0x4] sm:$0xf]
  %v143 = vld [vmem:[%s1 + $0x8] sm:$0xf]
  %v144 = vld [vmem:[%s1 + $0xc] sm:$0xf]
  %s145 = scalar_lea.vmem %s1, 16
  %v146 = vld [vmem:[%s145] sm:$0xf]
  %v147 = vld [vmem:[%s145 + $0x4] sm:$0xf]
  %v148 = vld [vmem:[%s145 + $0x8] sm:$0xf]
  %v149 = vld [vmem:[%s145 + $0xc] sm:$0xf]
  %v154 = vunpack.c.l.b16 %v146
  %v155 = vunpack.c.l.b16 %v147
  %v156 = vunpack.c.l.b16 %v148
  %v157 = vunpack.c.l.b16 %v149
  %v158 = vpack.c.b16 %v155, %v154
  %v159 = vpack.c.b16 %v157, %v156
  %vm160 = vcmask 654336
  %v162 = vsel %vm160, %v158, 0
  %v165 = vsel %vm160, %v159, 0
  %167 = vmatprep.subr.bf16.mxu0 0
  %168 = vmatpush1.bf16.msra.mxu0 0
  %169 = vmatprep.subr.bf16.mxu0 0
  %170 = vmatpush1.bf16.msra.mxu0 0
  %171 = vmatprep.subr.bf16.mxu0 0
  %172 = vmatpush1.bf16.msra.mxu0 0
  %173 = vmatprep.subr.bf16.mxu0 %v139
  %174 = vmatpush1.bf16.msra.mxu0 %v138
  %175 = vmatprep.subr.bf16.mxu0 %v136
  %176 = vmatpush1.bf16.msra.mxu0 %v135
  %177 = vmatprep.subr.bf16.mxu0 %v133
  %178 = vmatpush1.bf16.msra.mxu0 %v132
  %179 = vmatprep.subr.bf16.mxu0 %v130
  %180 = vmatpush1.bf16.msra.mxu0 %v129
  %181 = vmatprep.subr.bf16.mxu0 %v127
  %182 = vmatpush1.bf16.msra.mxu0 %v126
  %183 = vmatprep.subr.bf16.mxu0 0
  %184 = vmatpush2.bf16.msra.mxu0 0
  %185 = vmatprep.subr.bf16.mxu0 0
  %186 = vmatpush2.bf16.msra.mxu0 0
  %187 = vmatprep.subr.bf16.mxu0 0
  %188 = vmatpush2.bf16.msra.mxu0 0
  %189 = vmatprep.subr.bf16.mxu0 0
  %190 = vmatpush2.bf16.msra.mxu0 0
  %191 = vmatprep.subr.bf16.mxu0 0
  %192 = vmatpush2.bf16.msra.mxu0 0
  %193 = vmatprep.subr.bf16.mxu0 0
  %194 = vmatpush2.bf16.msra.mxu0 0
  %195 = vmatprep.subr.bf16.mxu0 0
  %196 = vmatpush2.bf16.msra.mxu0 0
  %197 = vmatprep.subr.bf16.mxu0 0
  %198 = vmatpush2.bf16.msra.mxu0 0
  %199 = vmatprep.mubr.bf16.mxu0 0
  %200 = vmatmul.mubr.bf16.gmra.mxu0 %v162
  %v201 = vpop.f32.mrf.mxu0
  %v202 = vadd.f32 0.0, %v201
  %v203 = vpop.f32.mrf.mxu0
  %v204 = vadd.f32 0.0, %v203
  %v205 = vpop.f32.mrf.mxu0
  %v206 = vadd.f32 0.0, %v205
  %v207 = vpop.f32.mrf.mxu0
  %v208 = vadd.f32 0.0, %v207
  %209 = vmatprep.mubr.bf16.mxu0 0
  %210 = vmatmul.mubr.bf16.gmra.mxu0 %v165
  %v211 = vpop.f32.mrf.mxu0
  %v212 = vadd.f32 0.0, %v211
  %v213 = vpop.f32.mrf.mxu0
  %v214 = vadd.f32 0.0, %v213
  %v215 = vpop.f32.mrf.mxu0
  %v216 = vadd.f32 0.0, %v215
  %v217 = vpop.f32.mrf.mxu0
  %v218 = vadd.f32 0.0, %v217
  %219 = vdwg.mxu0
  %220 = vmatprep.subr.bf16.mxu0 0
  %221 = vmatpush1.bf16.msra.mxu0 0
  %222 = vmatprep.subr.bf16.mxu0 0
  %223 = vmatpush1.bf16.msra.mxu0 0
  %224 = vmatprep.subr.bf16.mxu0 0
  %225 = vmatpush1.bf16.msra.mxu0 0
  %226 = vmatprep.subr.bf16.mxu0 0
  %227 = vmatpush1.bf16.msra.mxu0 %v140
  %228 = vmatprep.subr.bf16.mxu0 0
  %229 = vmatpush1.bf16.msra.mxu0 %v137
  %230 = vmatprep.subr.bf16.mxu0 0
  %231 = vmatpush1.bf16.msra.mxu0 %v134
  %232 = vmatprep.subr.bf16.mxu0 0
  %233 = vmatpush1.bf16.msra.mxu0 %v131
  %234 = vmatprep.subr.bf16.mxu0 0
  %235 = vmatpush1.bf16.msra.mxu0 %v128
  %236 = vmatprep.subr.bf16.mxu0 0
  %237 = vmatpush2.bf16.msra.mxu0 0
  %238 = vmatprep.subr.bf16.mxu0 0
  %239 = vmatpush2.bf16.msra.mxu0 0
  %240 = vmatprep.subr.bf16.mxu0 0
  %241 = vmatpush2.bf16.msra.mxu0 0
  %242 = vmatprep.subr.bf16.mxu0 0
  %243 = vmatpush2.bf16.msra.mxu0 0
  %244 = vmatprep.subr.bf16.mxu0 0
  %245 = vmatpush2.bf16.msra.mxu0 0
  %246 = vmatprep.subr.bf16.mxu0 0
  %247 = vmatpush2.bf16.msra.mxu0 0
  %248 = vmatprep.subr.bf16.mxu0 0
  %249 = vmatpush2.bf16.msra.mxu0 0
  %250 = vmatprep.subr.bf16.mxu0 0
  %251 = vmatpush2.bf16.msra.mxu0 0
  %252 = vmatprep.mubr.bf16.mxu0 0
  %253 = vmatmul.mubr.bf16.gmra.mxu0 %v162
  %v254 = vpop.f32.mrf.mxu0
  %v255 = vadd.f32 0.0, %v254
  %v256 = vpop.f32.mrf.mxu0
  %v257 = vpop.f32.mrf.mxu0
  %v258 = vadd.f32 0.0, %v257
  %v259 = vpop.f32.mrf.mxu0
  %260 = vmatprep.mubr.bf16.mxu0 0
  %261 = vmatmul.mubr.bf16.gmra.mxu0 %v165
  %v262 = vpop.f32.mrf.mxu0
  %v263 = vadd.f32 0.0, %v262
  %v264 = vpop.f32.mrf.mxu0
  %v265 = vpop.f32.mrf.mxu0
  %v266 = vadd.f32 0.0, %v265
  %v267 = vpop.f32.mrf.mxu0
  %268 = vdwg.mxu0
  %v273 = vunpack.c.l.b16 %v141
  %v274 = vunpack.c.l.b16 %v142
  %v275 = vunpack.c.l.b16 %v143
  %v276 = vunpack.c.l.b16 %v144
  %v277 = vpack.c.b16 %v274, %v273
  %v278 = vpack.c.b16 %v276, %v275
  %v280 = vsel %vm160, %v277, 0
  %v283 = vsel %vm160, %v278, 0
  %285 = vmatprep.subr.bf16.mxu0 0
  %286 = vmatpush1.bf16.msra.mxu0 0
  %287 = vmatprep.subr.bf16.mxu0 0
  %288 = vmatpush1.bf16.msra.mxu0 0
  %289 = vmatprep.subr.bf16.mxu0 0
  %290 = vmatpush1.bf16.msra.mxu0 0
  %291 = vmatprep.subr.bf16.mxu0 %v139
  %292 = vmatpush1.bf16.msra.mxu0 %v138
  %293 = vmatprep.subr.bf16.mxu0 %v136
  %294 = vmatpush1.bf16.msra.mxu0 %v135
  %295 = vmatprep.subr.bf16.mxu0 %v133
  %296 = vmatpush1.bf16.msra.mxu0 %v132
  %297 = vmatprep.subr.bf16.mxu0 %v130
  %298 = vmatpush1.bf16.msra.mxu0 %v129
  %299 = vmatprep.subr.bf16.mxu0 %v127
  %300 = vmatpush1.bf16.msra.mxu0 %v126
  %301 = vmatprep.subr.bf16.mxu0 0
  %302 = vmatpush2.bf16.msra.mxu0 0
  %303 = vmatprep.subr.bf16.mxu0 0
  %304 = vmatpush2.bf16.msra.mxu0 0
  %305 = vmatprep.subr.bf16.mxu0 0
  %306 = vmatpush2.bf16.msra.mxu0 0
  %307 = vmatprep.subr.bf16.mxu0 0
  %308 = vmatpush2.bf16.msra.mxu0 0
  %309 = vmatprep.subr.bf16.mxu0 0
  %310 = vmatpush2.bf16.msra.mxu0 0
  %311 = vmatprep.subr.bf16.mxu0 0
  %312 = vmatpush2.bf16.msra.mxu0 0
  %313 = vmatprep.subr.bf16.mxu0 0
  %314 = vmatpush2.bf16.msra.mxu0 0
  %315 = vmatprep.subr.bf16.mxu0 0
  %316 = vmatpush2.bf16.msra.mxu0 0
  %317 = vmatprep.mubr.bf16.mxu0 0
  %318 = vmatmul.mubr.bf16.gmra.mxu0 %v280
  %v319 = vpop.f32.mrf.mxu0
  %v320 = vadd.f32 %v202, %v319
  %v321 = vpop.f32.mrf.mxu0
  %v322 = vadd.f32 %v204, %v321
  %v323 = vpop.f32.mrf.mxu0
  %v324 = vadd.f32 %v206, %v323
  %v325 = vpop.f32.mrf.mxu0
  %v326 = vadd.f32 %v208, %v325
  %327 = vmatprep.mubr.bf16.mxu0 0
  %328 = vmatmul.mubr.bf16.gmra.mxu0 %v283
  %v329 = vpop.f32.mrf.mxu0
  %v330 = vadd.f32 %v212, %v329
  %v331 = vpop.f32.mrf.mxu0
  %v332 = vadd.f32 %v214, %v331
  %v333 = vpop.f32.mrf.mxu0
  %v334 = vadd.f32 %v216, %v333
  %v335 = vpop.f32.mrf.mxu0
  %v336 = vadd.f32 %v218, %v335
  %337 = vdwg.mxu0
  %338 = vmatprep.subr.bf16.mxu0 0
  %339 = vmatpush1.bf16.msra.mxu0 0
  %340 = vmatprep.subr.bf16.mxu0 0
  %341 = vmatpush1.bf16.msra.mxu0 0
  %342 = vmatprep.subr.bf16.mxu0 0
  %343 = vmatpush1.bf16.msra.mxu0 0
  %344 = vmatprep.subr.bf16.mxu0 0
  %345 = vmatpush1.bf16.msra.mxu0 %v140
  %346 = vmatprep.subr.bf16.mxu0 0
  %347 = vmatpush1.bf16.msra.mxu0 %v137
  %348 = vmatprep.subr.bf16.mxu0 0
  %349 = vmatpush1.bf16.msra.mxu0 %v134
  %350 = vmatprep.subr.bf16.mxu0 0
  %351 = vmatpush1.bf16.msra.mxu0 %v131
  %352 = vmatprep.subr.bf16.mxu0 0
  %353 = vmatpush1.bf16.msra.mxu0 %v128
  %354 = vmatprep.subr.bf16.mxu0 0
  %355 = vmatpush2.bf16.msra.mxu0 0
  %356 = vmatprep.subr.bf16.mxu0 0
  %357 = vmatpush2.bf16.msra.mxu0 0
  %358 = vmatprep.subr.bf16.mxu0 0
  %359 = vmatpush2.bf16.msra.mxu0 0
  %360 = vmatprep.subr.bf16.mxu0 0
  %361 = vmatpush2.bf16.msra.mxu0 0
  %362 = vmatprep.subr.bf16.mxu0 0
  %363 = vmatpush2.bf16.msra.mxu0 0
  %364 = vmatprep.subr.bf16.mxu0 0
  %365 = vmatpush2.bf16.msra.mxu0 0
  %366 = vmatprep.subr.bf16.mxu0 0
  %367 = vmatpush2.bf16.msra.mxu0 0
  %368 = vmatprep.subr.bf16.mxu0 0
  %369 = vmatpush2.bf16.msra.mxu0 0
  %370 = vmatprep.mubr.bf16.mxu0 0
  %371 = vmatmul.mubr.bf16.gmra.mxu0 %v280
  %v372 = vpop.f32.mrf.mxu0
  %v373 = vadd.f32 %v255, %v372
  %v374 = vpop.f32.mrf.mxu0
  %v375 = vpop.f32.mrf.mxu0
  %v376 = vadd.f32 %v258, %v375
  %v377 = vpop.f32.mrf.mxu0
  %378 = vmatprep.mubr.bf16.mxu0 0
  %379 = vmatmul.mubr.bf16.gmra.mxu0 %v283
  %v380 = vpop.f32.mrf.mxu0
  %v381 = vadd.f32 %v263, %v380
  %v382 = vpop.f32.mrf.mxu0
  %v383 = vpop.f32.mrf.mxu0
  %v384 = vadd.f32 %v266, %v383
  %v385 = vpop.f32.mrf.mxu0
  %386 = vdwg.mxu0
  %s387 = scalar_lea.vmem %s1, 32
  %v388 = vld [vmem:[%s387] sm:$0xf]
  %v389 = vld [vmem:[%s387 + $0x4] sm:$0xf]
  %v390 = vld [vmem:[%s387 + $0x8] sm:$0xf]
  %v391 = vld [vmem:[%s387 + $0xc] sm:$0xf]
  %v396 = vunpack.c.l.b16 %v388
  %v397 = vunpack.c.l.b16 %v389
  %v398 = vunpack.c.l.b16 %v390
  %v399 = vunpack.c.l.b16 %v391
  %v400 = vpack.c.b16 %v397, %v396
  %v401 = vpack.c.b16 %v399, %v398
  %v403 = vsel %vm160, %v400, 0
  %v406 = vsel %vm160, %v401, 0
  %408 = vmatprep.subr.bf16.mxu0 0
  %409 = vmatpush1.bf16.msra.mxu0 0
  %410 = vmatprep.subr.bf16.mxu0 0
  %411 = vmatpush1.bf16.msra.mxu0 0
  %412 = vmatprep.subr.bf16.mxu0 0
  %413 = vmatpush1.bf16.msra.mxu0 0
  %414 = vmatprep.subr.bf16.mxu0 %v139
  %415 = vmatpush1.bf16.msra.mxu0 %v138
  %416 = vmatprep.subr.bf16.mxu0 %v136
  %417 = vmatpush1.bf16.msra.mxu0 %v135
  %418 = vmatprep.subr.bf16.mxu0 %v133
  %419 = vmatpush1.bf16.msra.mxu0 %v132
  %420 = vmatprep.subr.bf16.mxu0 %v130
  %421 = vmatpush1.bf16.msra.mxu0 %v129
  %422 = vmatprep.subr.bf16.mxu0 %v127
  %423 = vmatpush1.bf16.msra.mxu0 %v126
  %424 = vmatprep.subr.bf16.mxu0 0
  %425 = vmatpush2.bf16.msra.mxu0 0
  %426 = vmatprep.subr.bf16.mxu0 0
  %427 = vmatpush2.bf16.msra.mxu0 0
  %428 = vmatprep.subr.bf16.mxu0 0
  %429 = vmatpush2.bf16.msra.mxu0 0
  %430 = vmatprep.subr.bf16.mxu0 0
  %431 = vmatpush2.bf16.msra.mxu0 0
  %432 = vmatprep.subr.bf16.mxu0 0
  %433 = vmatpush2.bf16.msra.mxu0 0
  %434 = vmatprep.subr.bf16.mxu0 0
  %435 = vmatpush2.bf16.msra.mxu0 0
  %436 = vmatprep.subr.bf16.mxu0 0
  %437 = vmatpush2.bf16.msra.mxu0 0
  %438 = vmatprep.subr.bf16.mxu0 0
  %439 = vmatpush2.bf16.msra.mxu0 0
  %440 = vmatprep.mubr.bf16.mxu0 0
  %441 = vmatmul.mubr.bf16.gmra.mxu0 %v403
  %v442 = vpop.f32.mrf.mxu0
  %v443 = vadd.f32 0.0, %v442
  %v444 = vpop.f32.mrf.mxu0
  %v445 = vadd.f32 0.0, %v444
  %v446 = vpop.f32.mrf.mxu0
  %v447 = vadd.f32 0.0, %v446
  %v448 = vpop.f32.mrf.mxu0
  %v449 = vadd.f32 0.0, %v448
  %450 = vmatprep.mubr.bf16.mxu0 0
  %451 = vmatmul.mubr.bf16.gmra.mxu0 %v406
  %v452 = vpop.f32.mrf.mxu0
  %v453 = vadd.f32 0.0, %v452
  %v454 = vpop.f32.mrf.mxu0
  %v455 = vadd.f32 0.0, %v454
  %v456 = vpop.f32.mrf.mxu0
  %v457 = vadd.f32 0.0, %v456
  %v458 = vpop.f32.mrf.mxu0
  %v459 = vadd.f32 0.0, %v458
  %460 = vdwg.mxu0
  %461 = vmatprep.subr.bf16.mxu0 0
  %462 = vmatpush1.bf16.msra.mxu0 0
  %463 = vmatprep.subr.bf16.mxu0 0
  %464 = vmatpush1.bf16.msra.mxu0 0
  %465 = vmatprep.subr.bf16.mxu0 0
  %466 = vmatpush1.bf16.msra.mxu0 0
  %467 = vmatprep.subr.bf16.mxu0 0
  %468 = vmatpush1.bf16.msra.mxu0 %v140
  %469 = vmatprep.subr.bf16.mxu0 0
  %470 = vmatpush1.bf16.msra.mxu0 %v137
  %471 = vmatprep.subr.bf16.mxu0 0
  %472 = vmatpush1.bf16.msra.mxu0 %v134
  %473 = vmatprep.subr.bf16.mxu0 0
  %474 = vmatpush1.bf16.msra.mxu0 %v131
  %475 = vmatprep.subr.bf16.mxu0 0
  %476 = vmatpush1.bf16.msra.mxu0 %v128
  %477 = vmatprep.subr.bf16.mxu0 0
  %478 = vmatpush2.bf16.msra.mxu0 0
  %479 = vmatprep.subr.bf16.mxu0 0
  %480 = vmatpush2.bf16.msra.mxu0 0
  %481 = vmatprep.subr.bf16.mxu0 0
  %482 = vmatpush2.bf16.msra.mxu0 0
  %483 = vmatprep.subr.bf16.mxu0 0
  %484 = vmatpush2.bf16.msra.mxu0 0
  %485 = vmatprep.subr.bf16.mxu0 0
  %486 = vmatpush2.bf16.msra.mxu0 0
  %487 = vmatprep.subr.bf16.mxu0 0
  %488 = vmatpush2.bf16.msra.mxu0 0
  %489 = vmatprep.subr.bf16.mxu0 0
  %490 = vmatpush2.bf16.msra.mxu0 0
  %491 = vmatprep.subr.bf16.mxu0 0
  %492 = vmatpush2.bf16.msra.mxu0 0
  %493 = vmatprep.mubr.bf16.mxu0 0
  %494 = vmatmul.mubr.bf16.gmra.mxu0 %v403
  %v495 = vpop.f32.mrf.mxu0
  %v496 = vadd.f32 0.0, %v495
  %v497 = vpop.f32.mrf.mxu0
  %v498 = vpop.f32.mrf.mxu0
  %v499 = vadd.f32 0.0, %v498
  %v500 = vpop.f32.mrf.mxu0
  %501 = vmatprep.mubr.bf16.mxu0 0
  %502 = vmatmul.mubr.bf16.gmra.mxu0 %v406
  %v503 = vpop.f32.mrf.mxu0
  %v504 = vadd.f32 0.0, %v503
  %v505 = vpop.f32.mrf.mxu0
  %v506 = vpop.f32.mrf.mxu0
  %v507 = vadd.f32 0.0, %v506
  %v508 = vpop.f32.mrf.mxu0
  %509 = vdwg.mxu0
  %v510 = vadd.f32 %v320, %v443
  %v511 = vadd.f32 %v322, %v445
  %v512 = vadd.f32 %v373, %v496
  %v513 = vadd.f32 %v324, %v447
  %v514 = vadd.f32 %v326, %v449
  %v515 = vadd.f32 %v376, %v499
  %v516 = vadd.f32 %v330, %v453
  %v517 = vadd.f32 %v332, %v455
  %v518 = vadd.f32 %v381, %v504
  %v519 = vadd.f32 %v334, %v457
  %v520 = vadd.f32 %v336, %v459
  %v521 = vadd.f32 %v384, %v507
  %v522 = vmul.f32 %v510, %v512
  %v523 = vmul.f32 %v513, %v515
  %v524 = vmul.f32 %v516, %v518
  %v525 = vmul.f32 %v519, %v521
  %v526 = vmul.f32 %v522, %v511
  %v527 = vmul.f32 %v523, %v514
  %v528 = vmul.f32 %v524, %v517
  %v529 = vmul.f32 %v525, %v520
  %v530 = vadd.f32 %v526, %v527
  %v531 = vadd.f32 %v530, %v528
  %v532 = vadd.f32 %v531, %v529
  %v533 = vrot.slane %v532, 4
  %v534 = vadd.f32 %v532, %v533
  %v535 = vrot.slane %v534, 2
  %v536 = vadd.f32 %v534, %v535
  %v537 = vrot.slane %v536, 1
  %v538 = vadd.f32 %v536, %v537
  %v539 = vsub.f32 0.0, %v538
  %v540 = vmul.f32 %v510, %v510
  %v541 = vmul.f32 %v511, %v511
  %v542 = vmul.f32 %v512, %v512
  %v543 = vmul.f32 %v513, %v513
  %v544 = vmul.f32 %v514, %v514
  %v545 = vmul.f32 %v515, %v515
  %v546 = vmul.f32 %v516, %v516
  %v547 = vmul.f32 %v517, %v517
  %v548 = vmul.f32 %v518, %v518
  %v549 = vmul.f32 %v519, %v519
  %v550 = vmul.f32 %v520, %v520
  %v551 = vmul.f32 %v521, %v521
  %v552 = vadd.f32 %v540, %v543
  %v553 = vadd.f32 %v552, %v546
  %v554 = vadd.f32 %v553, %v549
  %v555 = vrot.slane %v554, 4
  %v556 = vadd.f32 %v554, %v555
  %v557 = vrot.slane %v556, 2
  %v558 = vadd.f32 %v556, %v557
  %v559 = vrot.slane %v558, 1
  %v560 = vadd.f32 %v558, %v559
  %v561 = vadd.f32 %v541, %v544
  %v562 = vadd.f32 %v561, %v547
  %v563 = vadd.f32 %v562, %v550
  %v564 = vrot.slane %v563, 4
  %v565 = vadd.f32 %v563, %v564
  %v566 = vrot.slane %v565, 2
  %v567 = vadd.f32 %v565, %v566
  %v568 = vrot.slane %v567, 1
  %v569 = vadd.f32 %v567, %v568
  %v570 = vadd.f32 %v542, %v545
  %v571 = vadd.f32 %v570, %v548
  %v572 = vadd.f32 %v571, %v551
  %v573 = vrot.slane %v572, 4
  %v574 = vadd.f32 %v572, %v573
  %v575 = vrot.slane %v574, 2
  %v576 = vadd.f32 %v574, %v575
  %v577 = vrot.slane %v576, 1
  %v578 = vadd.f32 %v576, %v577
  %v579 = vadd.f32 %v560, %v569
  %v580 = vadd.f32 %v579, %v578
  %581 = vst [vmem:[%s2] sm:$0x1] %v539
  %582 = vst [vmem:[%s2 + $0x1] sm:$0x1] %v580
  // Predicated region
  $region10: #{distmult_forward.1} parent=0 // pred_check
    _
  $region11: #{distmult_forward.1} parent=0 // pred_check_branch
    %584 = sbr.rel (0) target = $region13
  $region12: #{distmult_forward.1} parent=0 // pred_region
    _
  $region13: #{distmult_forward.1} parent=0 // pred_fallthru
    _
  // Predicated region
  $region14: #{distmult_forward.1} parent=0 // pred_check
    _
  $region15: #{distmult_forward.1} parent=0 // pred_check_branch
    %586 = sbr.rel (0) target = $region17
  $region16: #{distmult_forward.1} parent=0 // pred_region
    _
  $region17: #{distmult_forward.1} parent=0 // pred_fallthru
    _

</llo_original>
